<compile_context>
chip_gen: v6e
topology: v6e:2x2x1
jax: 0.10.0
libtpu: 0.0.40
codegen_flags: <defaults>
</compile_context>

<pallas_src>
import jax
import jax.numpy as jnp
from jax.experimental import pallas as pl
from jax.experimental.pallas import tpu as pltpu


def gene_specific_kernel(
    tf_ref, cre_ref,
    w1_ref, b1_ref,          # TF_TF      : w (n_TFs, n_TFs)  pre-masked, (in,out) layout
    w2a_ref, w2b_ref, b2_ref,  # TF_CRE   : w2a (n_TFs, n_CREs), w2b (n_CREs, n_CREs)
    w3_ref, b3_ref,          # CRE_CRE    : w (n_CREs, n_direct)
    w4_ref, b4_ref,          # CRE_Target : w (1, n_direct) row
    out_ref,
):
    f32 = jnp.float32
    mm_dtype = w1_ref.dtype          # matmul operand dtype (f32 or bf16)

    x = tf_ref[...]                  # (TB, n_TFs)   f32
    cre = cre_ref[...]               # (TB, n_CREs)  f32

    # ---- TF_TF layer + ReLU (weights already masked & transposed to (in,out)) ----
    h1 = jnp.dot(x.astype(mm_dtype), w1_ref[...],
                 preferred_element_type=f32) + b1_ref[...]
    h1 = jnp.maximum(h1, 0.0)        # (TB, n_TFs)  f32

    # ---- TF_CRE layer: concat([h1, cre]) @ W2.T == h1 @ w2a + cre @ w2b ----
    h2 = (jnp.dot(h1.astype(mm_dtype), w2a_ref[...], preferred_element_type=f32)
          + jnp.dot(cre.astype(mm_dtype), w2b_ref[...], preferred_element_type=f32)
          + b2_ref[...])
    h2 = jnp.maximum(h2, 0.0)        # (TB, n_CREs) f32

    # ---- CRE_CRE layer + ReLU ----
    h3 = jnp.dot(h2.astype(mm_dtype), w3_ref[...],
                 preferred_element_type=f32) + b3_ref[...]
    h3 = jnp.maximum(h3, 0.0)        # (TB, n_direct) f32

    # ---- CRE_Target layer: single output row -> VPU multiply + lane reduce ----
    out = jnp.sum(h3 * w4_ref[...].astype(f32), axis=-1, keepdims=True) + b4_ref[...]
    out_ref[...] = out.astype(out_ref.dtype)   # (TB, 1)


def prepare_params(raw, compute_dtype=jnp.float32):
    """Bake masks in once, split W2, pre-transpose weights to (in, out) layout.

    raw = dict with w1..w4, m1..m4 (PyTorch (out,in) layout), b1..b4 ((1,out)).
    Set compute_dtype=jnp.bfloat16 on v6e/v7x for MXU-native operands
    (accumulation stays f32 inside the kernel; biases/ReLU stay f32).
    """
    n_tfs = raw["w1"].shape[0]
    w1 = (raw["w1"] * raw["m1"]).T.astype(compute_dtype)          # (n_TFs, n_TFs)
    w2 = raw["w2"] * raw["m2"]                                    # (n_CREs, n_TFs+n_CREs)
    w2a = w2[:, :n_tfs].T.astype(compute_dtype)                   # (n_TFs, n_CREs)
    w2b = w2[:, n_tfs:].T.astype(compute_dtype)                   # (n_CREs, n_CREs)
    w3 = (raw["w3"] * raw["m3"]).T.astype(compute_dtype)          # (n_CREs, n_direct)
    w4 = (raw["w4"] * raw["m4"]).astype(compute_dtype)            # (1, n_direct) row
    return dict(
        w1=w1, b1=raw["b1"].astype(jnp.float32),
        w2a=w2a, w2b=w2b, b2=raw["b2"].astype(jnp.float32),
        w3=w3, b3=raw["b3"].astype(jnp.float32),
        w4=w4, b4=raw["b4"].astype(jnp.float32),
    )


def gene_specific_forward(tf_expr, cre_expr, kp, *, block_b=8):
    """kp = prepare_params(...) output. Batch is tiled over a parallel grid axis."""
    B, n_tfs = tf_expr.shape
    n_cres = cre_expr.shape[1]

    # Pad batch to a multiple of the sublane tile so blocks are (8k, full-width).
    Bp = ((B + block_b - 1) // block_b) * block_b
    if Bp != B:
        pad = Bp - B
        tf_expr = jnp.pad(tf_expr, ((0, pad), (0, 0)))
        cre_expr = jnp.pad(cre_expr, ((0, pad), (0, 0)))

    args = [
        tf_expr, cre_expr,
        kp["w1"], kp["b1"],
        kp["w2a"], kp["w2b"], kp["b2"],
        kp["w3"], kp["b3"],
        kp["w4"], kp["b4"],
    ]

    def act_spec(width):
        return pl.BlockSpec((block_b, width), lambda i: (i, 0))

    def resident_spec(arr):
        # Constant block index across the grid -> weight/bias stays VMEM-resident,
        # no re-DMA per batch chunk.
        return pl.BlockSpec(arr.shape, lambda i: (0, 0))

    in_specs = [act_spec(n_tfs), act_spec(n_cres)] + [resident_spec(a) for a in args[2:]]

    # TODO(synk): when evaluating many GeneSpecificModels, stack gene weight sets on a
    # second grid axis and emit a lane-dense (B, n_genes) output instead of (B, 1).
    out = pl.pallas_call(
        gene_specific_kernel,
        out_shape=jax.ShapeDtypeStruct((Bp, 1), jnp.float32),
        grid=(Bp // block_b,),
        in_specs=in_specs,
        out_specs=pl.BlockSpec((block_b, 1), lambda i: (i, 0)),
        compiler_params=pltpu.CompilerParams(dimension_semantics=("parallel",)),
    )(*args)
    return out[:B]


# ----------------------------- parameter init -------------------------------

def _kaiming_uniform(key, shape):
    # nn.init.kaiming_uniform_(w, a=sqrt(5)) -> U(-bound, bound), bound = 1/sqrt(fan_in)
    fan_in = shape[1]
    bound = 1.0 / jnp.sqrt(jnp.float32(fan_in))
    return jax.random.uniform(key, shape, jnp.float32, -bound, bound)


def _bias_init(key, out_features, fan_in):
    bound = 1.0 / jnp.sqrt(jnp.float32(fan_in))
    return jax.random.uniform(key, (1, out_features), jnp.float32, -bound, bound)


def make_raw_params(key, n_tfs, n_cres, n_direct):
    keys = jax.random.split(key, 12)
    shapes = [
        (n_tfs, n_tfs),             # TF_TF
        (n_cres, n_tfs + n_cres),   # TF_CRE
        (n_direct, n_cres),         # CRE_CRE
        (1, n_direct),              # CRE_Target
    ]
    params = {}
    for i, shp in enumerate(shapes):
        wk, mk, bk = keys[3 * i], keys[3 * i + 1], keys[3 * i + 2]
        mask = jax.random.bernoulli(mk, p=0.6, shape=shp).astype(jnp.float32)
        w = _kaiming_uniform(wk, shp) * mask   # init-time weight.data.mul_(mask)
        b = _bias_init(bk, shp[0], shp[1])
        params[f"w{i+1}"] = w
        params[f"m{i+1}"] = mask
        params[f"b{i+1}"] = b
    return params


def reference_forward(tf_expr, cre_expr, p):
    """Plain-JAX reference mirroring the PyTorch forward (uses raw params)."""
    h1 = jnp.maximum(tf_expr @ (p["w1"] * p["m1"]).T + p["b1"], 0.0)
    cat = jnp.concatenate([h1, cre_expr], axis=1)
    h2 = jnp.maximum(cat @ (p["w2"] * p["m2"]).T + p["b2"], 0.0)
    h3 = jnp.maximum(h2 @ (p["w3"] * p["m3"]).T + p["b3"], 0.0)
    return h3 @ (p["w4"] * p["m4"]).T + p["b4"]


if __name__ == "__main__":
    B, N_TFS, N_CRES, N_DIRECT = 16, 32, 64, 16

    key = jax.random.PRNGKey(0)
    k_params, k_tf, k_cre = jax.random.split(key, 3)

    raw = make_raw_params(k_params, N_TFS, N_CRES, N_DIRECT)
    kernel_params = prepare_params(raw, compute_dtype=jnp.float32)

    tf_expr = jax.random.normal(k_tf, (B, N_TFS), jnp.float32)
    cre_expr = jax.random.normal(k_cre, (B, N_CRES), jnp.float32)

    out = gene_specific_forward(tf_expr, cre_expr, kernel_params)
    out = jax.block_until_ready(out)

    ref = reference_forward(tf_expr, cre_expr, raw)
    assert out.shape == (B, 1)
    assert jnp.allclose(out, ref, atol=1e-4, rtol=1e-4), "mismatch vs JAX reference"

    print("KERNEL_OK")
</pallas_src>

<mosaic_0001>
module attributes {stable_mosaic.version = 11 : i64} {
  func.func @gene_specific_kernel(%arg0: i32, %arg1: memref<8x32xf32, #tpu.memory_space<vmem>>, %arg2: memref<8x64xf32, #tpu.memory_space<vmem>>, %arg3: memref<32x32xf32, #tpu.memory_space<vmem>>, %arg4: memref<1x32xf32, #tpu.memory_space<vmem>>, %arg5: memref<32x64xf32, #tpu.memory_space<vmem>>, %arg6: memref<64x64xf32, #tpu.memory_space<vmem>>, %arg7: memref<1x64xf32, #tpu.memory_space<vmem>>, %arg8: memref<64x16xf32, #tpu.memory_space<vmem>>, %arg9: memref<1x16xf32, #tpu.memory_space<vmem>>, %arg10: memref<1x16xf32, #tpu.memory_space<vmem>>, %arg11: memref<1x1xf32, #tpu.memory_space<vmem>>, %arg12: memref<8x1xf32, #tpu.memory_space<vmem>>) attributes {dimension_semantics = [#tpu.dimension_semantics<parallel>], iteration_bounds = array<i64: 2>, scalar_prefetch = 0 : i64, scratch_operands = 0 : i64, tpu.core_type = #tpu.core_type<tc>, window_params = [{transform_indices = @transform_0, window_bounds = array<i64: 8, 32>}, {transform_indices = @transform_1, window_bounds = array<i64: 8, 64>}, {pipeline_mode = #tpu.pipeline_mode<synchronous>, transform_indices = @transform_2, window_bounds = array<i64: 32, 32>}, {pipeline_mode = #tpu.pipeline_mode<synchronous>, transform_indices = @transform_3, window_bounds = array<i64: 1, 32>}, {pipeline_mode = #tpu.pipeline_mode<synchronous>, transform_indices = @transform_4, window_bounds = array<i64: 32, 64>}, {pipeline_mode = #tpu.pipeline_mode<synchronous>, transform_indices = @transform_5, window_bounds = array<i64: 64, 64>}, {pipeline_mode = #tpu.pipeline_mode<synchronous>, transform_indices = @transform_6, window_bounds = array<i64: 1, 64>}, {pipeline_mode = #tpu.pipeline_mode<synchronous>, transform_indices = @transform_7, window_bounds = array<i64: 64, 16>}, {pipeline_mode = #tpu.pipeline_mode<synchronous>, transform_indices = @transform_8, window_bounds = array<i64: 1, 16>}, {pipeline_mode = #tpu.pipeline_mode<synchronous>, transform_indices = @transform_9, window_bounds = array<i64: 1, 16>}, {pipeline_mode = #tpu.pipeline_mode<synchronous>, transform_indices = @transform_10, window_bounds = array<i64: 1, 1>}, {transform_indices = @transform_11, window_bounds = array<i64: 8, 1>}]} {
    %c0 = arith.constant 0 : index
    %c0_0 = arith.constant 0 : index
    %0 = vector.load %arg1[%c0, %c0_0] : memref<8x32xf32, #tpu.memory_space<vmem>>, vector<8x32xf32>
    %c0_1 = arith.constant 0 : index
    %c0_2 = arith.constant 0 : index
    %1 = vector.load %arg2[%c0_1, %c0_2] : memref<8x64xf32, #tpu.memory_space<vmem>>, vector<8x64xf32>
    %c0_3 = arith.constant 0 : index
    %c0_4 = arith.constant 0 : index
    %2 = vector.load %arg3[%c0_3, %c0_4] : memref<32x32xf32, #tpu.memory_space<vmem>>, vector<32x32xf32>
    %cst = arith.constant dense<0.000000e+00> : vector<8x32xf32>
    %3 = tpu.matmul %0, %2, %cst {dimension_numbers = #tpu.dot_dimension_numbers<[1], [0], [0], [1], [0, 0, 1, 1], [], []>} : vector<8x32xf32>, vector<32x32xf32>, vector<8x32xf32> -> vector<8x32xf32>
    %c0_5 = arith.constant 0 : index
    %c0_6 = arith.constant 0 : index
    %4 = vector.load %arg4[%c0_5, %c0_6] : memref<1x32xf32, #tpu.memory_space<vmem>>, vector<1x32xf32>
    %5 = vector.broadcast %4 : vector<1x32xf32> to vector<8x32xf32>
    %6 = arith.addf %3, %5 : vector<8x32xf32>
    %cst_7 = arith.constant 0.000000e+00 : f32
    %7 = vector.broadcast %cst_7 : f32 to vector<8x32xf32>
    %8 = arith.maximumf %6, %7 : vector<8x32xf32>
    %c0_8 = arith.constant 0 : index
    %c0_9 = arith.constant 0 : index
    %9 = vector.load %arg5[%c0_8, %c0_9] : memref<32x64xf32, #tpu.memory_space<vmem>>, vector<32x64xf32>
    %cst_10 = arith.constant dense<0.000000e+00> : vector<8x64xf32>
    %10 = tpu.matmul %8, %9, %cst_10 {dimension_numbers = #tpu.dot_dimension_numbers<[1], [0], [0], [1], [0, 0, 1, 1], [], []>} : vector<8x32xf32>, vector<32x64xf32>, vector<8x64xf32> -> vector<8x64xf32>
    %c0_11 = arith.constant 0 : index
    %c0_12 = arith.constant 0 : index
    %11 = vector.load %arg6[%c0_11, %c0_12] : memref<64x64xf32, #tpu.memory_space<vmem>>, vector<64x64xf32>
    %cst_13 = arith.constant dense<0.000000e+00> : vector<8x64xf32>
    %12 = tpu.matmul %1, %11, %cst_13 {dimension_numbers = #tpu.dot_dimension_numbers<[1], [0], [0], [1], [0, 0, 1, 1], [], []>} : vector<8x64xf32>, vector<64x64xf32>, vector<8x64xf32> -> vector<8x64xf32>
    %13 = arith.addf %10, %12 : vector<8x64xf32>
    %c0_14 = arith.constant 0 : index
    %c0_15 = arith.constant 0 : index
    %14 = vector.load %arg7[%c0_14, %c0_15] : memref<1x64xf32, #tpu.memory_space<vmem>>, vector<1x64xf32>
    %15 = vector.broadcast %14 : vector<1x64xf32> to vector<8x64xf32>
    %16 = arith.addf %13, %15 : vector<8x64xf32>
    %cst_16 = arith.constant 0.000000e+00 : f32
    %17 = vector.broadcast %cst_16 : f32 to vector<8x64xf32>
    %18 = arith.maximumf %16, %17 : vector<8x64xf32>
    %c0_17 = arith.constant 0 : index
    %c0_18 = arith.constant 0 : index
    %19 = vector.load %arg8[%c0_17, %c0_18] : memref<64x16xf32, #tpu.memory_space<vmem>>, vector<64x16xf32>
    %cst_19 = arith.constant dense<0.000000e+00> : vector<8x16xf32>
    %20 = tpu.matmul %18, %19, %cst_19 {dimension_numbers = #tpu.dot_dimension_numbers<[1], [0], [0], [1], [0, 0, 1, 1], [], []>} : vector<8x64xf32>, vector<64x16xf32>, vector<8x16xf32> -> vector<8x16xf32>
    %c0_20 = arith.constant 0 : index
    %c0_21 = arith.constant 0 : index
    %21 = vector.load %arg9[%c0_20, %c0_21] : memref<1x16xf32, #tpu.memory_space<vmem>>, vector<1x16xf32>
    %22 = vector.broadcast %21 : vector<1x16xf32> to vector<8x16xf32>
    %23 = arith.addf %20, %22 : vector<8x16xf32>
    %cst_22 = arith.constant 0.000000e+00 : f32
    %24 = vector.broadcast %cst_22 : f32 to vector<8x16xf32>
    %25 = arith.maximumf %23, %24 : vector<8x16xf32>
    %c0_23 = arith.constant 0 : index
    %c0_24 = arith.constant 0 : index
    %26 = vector.load %arg10[%c0_23, %c0_24] : memref<1x16xf32, #tpu.memory_space<vmem>>, vector<1x16xf32>
    %27 = vector.broadcast %26 : vector<1x16xf32> to vector<8x16xf32>
    %28 = arith.mulf %25, %27 : vector<8x16xf32>
    %cst_25 = arith.constant dense<0.000000e+00> : vector<8xf32>
    %29 = vector.multi_reduction <add>, %28, %cst_25 [1] : vector<8x16xf32> to vector<8xf32>
    %30 = vector.shape_cast %29 : vector<8xf32> to vector<8x1xf32>
    %c0_26 = arith.constant 0 : index
    %c0_27 = arith.constant 0 : index
    %31 = vector.load %arg11[%c0_26, %c0_27] : memref<1x1xf32, #tpu.memory_space<vmem>>, vector<1x1xf32>
    %32 = vector.broadcast %31 : vector<1x1xf32> to vector<8x1xf32>
    %33 = arith.addf %30, %32 : vector<8x1xf32>
    %c0_28 = arith.constant 0 : index
    %c0_29 = arith.constant 0 : index
    %34 = vector.load %arg12[%c0_28, %c0_29] : memref<8x1xf32, #tpu.memory_space<vmem>>, vector<8x1xf32>
    tpu.vector_store %arg12[%c0_28, %c0_29], %33 {strides = array<i32>} : memref<8x1xf32, #tpu.memory_space<vmem>>, vector<8x1xf32>,
    return
  }
  func.func @transform_0(%arg0: i32) -> (i32, i32) {
    %c0_i32 = arith.constant 0 : i32
    %c0_i32_0 = arith.constant 0 : i32
    return %arg0, %c0_i32 : i32, i32
  }
  func.func @transform_1(%arg0: i32) -> (i32, i32) {
    %c0_i32 = arith.constant 0 : i32
    %c0_i32_0 = arith.constant 0 : i32
    return %arg0, %c0_i32 : i32, i32
  }
  func.func @transform_2(%arg0: i32) -> (i32, i32) {
    %c0_i32 = arith.constant 0 : i32
    %c0_i32_0 = arith.constant 0 : i32
    %c0_i32_1 = arith.constant 0 : i32
    return %c0_i32, %c0_i32_0 : i32, i32
  }
  func.func @transform_3(%arg0: i32) -> (i32, i32) {
    %c0_i32 = arith.constant 0 : i32
    %c0_i32_0 = arith.constant 0 : i32
    %c0_i32_1 = arith.constant 0 : i32
    return %c0_i32, %c0_i32_0 : i32, i32
  }
  func.func @transform_4(%arg0: i32) -> (i32, i32) {
    %c0_i32 = arith.constant 0 : i32
    %c0_i32_0 = arith.constant 0 : i32
    %c0_i32_1 = arith.constant 0 : i32
    return %c0_i32, %c0_i32_0 : i32, i32
  }
  func.func @transform_5(%arg0: i32) -> (i32, i32) {
    %c0_i32 = arith.constant 0 : i32
    %c0_i32_0 = arith.constant 0 : i32
    %c0_i32_1 = arith.constant 0 : i32
    return %c0_i32, %c0_i32_0 : i32, i32
  }
  func.func @transform_6(%arg0: i32) -> (i32, i32) {
    %c0_i32 = arith.constant 0 : i32
    %c0_i32_0 = arith.constant 0 : i32
    %c0_i32_1 = arith.constant 0 : i32
    return %c0_i32, %c0_i32_0 : i32, i32
  }
  func.func @transform_7(%arg0: i32) -> (i32, i32) {
    %c0_i32 = arith.constant 0 : i32
    %c0_i32_0 = arith.constant 0 : i32
    %c0_i32_1 = arith.constant 0 : i32
    return %c0_i32, %c0_i32_0 : i32, i32
  }
  func.func @transform_8(%arg0: i32) -> (i32, i32) {
    %c0_i32 = arith.constant 0 : i32
    %c0_i32_0 = arith.constant 0 : i32
    %c0_i32_1 = arith.constant 0 : i32
    return %c0_i32, %c0_i32_0 : i32, i32
  }
  func.func @transform_9(%arg0: i32) -> (i32, i32) {
    %c0_i32 = arith.constant 0 : i32
    %c0_i32_0 = arith.constant 0 : i32
    %c0_i32_1 = arith.constant 0 : i32
    return %c0_i32, %c0_i32_0 : i32, i32
  }
  func.func @transform_10(%arg0: i32) -> (i32, i32) {
    %c0_i32 = arith.constant 0 : i32
    %c0_i32_0 = arith.constant 0 : i32
    %c0_i32_1 = arith.constant 0 : i32
    return %c0_i32, %c0_i32_0 : i32, i32
  }
  func.func @transform_11(%arg0: i32) -> (i32, i32) {
    %c0_i32 = arith.constant 0 : i32
    %c0_i32_0 = arith.constant 0 : i32
    return %arg0, %c0_i32 : i32, i32
  }
}

</mosaic_0001>

<llo_original>
// kernel: tpu_custom_call.1
$region0: #{tpu_custom_call.1}
  #allocation0 [shape = 'u32[]', space=smem, size = 0x4, offset = 0x4, fixed_abs, tag = 'smem constant byte address 0x4 - core index']
  #allocation1 [shape = 'u32[144,128]{1,0:T(1,128)}', space=vmem, size = 0x12000, scoped, tag = 'internal scratch']
  #allocation2 [shape = 'f32[1,1]{1,0:T(1,128)S(1)}', space=vmem, size = 0x200, scoped, tag = 'scoped memory for tpu_custom_call.1']
  %s0 = inlined_call_operand.vmem [shape: f32[16,32], index: 0, kind: input, shape index: {}]
  %s1 = inlined_call_operand.hbm [shape: f32[16,64], index: 1, kind: input, shape index: {}]
  %s2 = inlined_call_operand.hbm [shape: f32[32,32], index: 2, kind: input, shape index: {}]
  %s3 = inlined_call_operand.vmem [shape: f32[1,32], index: 3, kind: input, shape index: {}]
  %s4 = inlined_call_operand.hbm [shape: f32[32,64], index: 4, kind: input, shape index: {}]
  %s5 = inlined_call_operand.vmem [shape: f32[64,64], index: 5, kind: input, shape index: {}]
  %s6 = inlined_call_operand.vmem [shape: f32[1,64], index: 6, kind: input, shape index: {}]
  %s7 = inlined_call_operand.vmem [shape: f32[64,16], index: 7, kind: input, shape index: {}]
  %s8 = inlined_call_operand.vmem [shape: f32[1,16], index: 8, kind: input, shape index: {}]
  %s9 = inlined_call_operand.vmem [shape: f32[1,16], index: 9, kind: input, shape index: {}]
  %s10 = inlined_call_operand.<no memory space> [shape: f32[1,1], index: 10, kind: input, shape index: {}]
  %s11 = inlined_call_operand.vmem [shape: f32[16,1], index: 11, kind: output, shape index: {}]
  %s12 = sld [smem:[#allocation0]]
  $region89: #{tpu_custom_call.1} parent=0
    _
  %s14 = ssub.s32 1, %s12
  %s15 = scalar_select 0, %s14, %s12
  %v16 = vstv %s10
  %17 = vst [vmem:[#allocation2] sm:$0x1] %v16
  $region1: #{tpu_custom_call.1} parent=0
    #allocation3 [shape = 'u8[8192]{0}', space=vmem, size = 0x2000, scoped, tag = 'input window, operand 1']
    #allocation4 [shape = 's32[2]{0}', space=sflag, size = 0x8, scoped, tag = 'scoped memory for tpu_custom_call.1']
    #allocation5 [shape = 'u8[16384]{0}', space=vmem, size = 0x4000, scoped, tag = 'input window, operand 2, single buffered']
    #allocation6 [shape = 's32[1]{0}', space=sflag, size = 0x4, scoped, tag = 'scoped memory for tpu_custom_call.1']
    #allocation7 [shape = 'u8[16384]{0}', space=vmem, size = 0x4000, scoped, tag = 'input window, operand 4, single buffered']
    %18 = vsyncpa [#allocation4], 0
    %s19 = scalar_lea.sflag [#allocation4], 1
    %20 = vsyncpa %s19, 0
    %21 = vsyncpa [#allocation6], 0
    loop: start=0, step=1, limit=4
    $region2: #{tpu_custom_call.1} parent=1 // loop_pre_header
      _
    $region3: #{tpu_custom_call.1} parent=1 // loop_header
      %s23 = sphi 0, %s27
      %p24 = scmp.ge.s32.totalorder %s23, 4
      %s33 = sphi 0, %s35
      %s36 = sphi 0, %s33
      %s37 = sphi 0, %s36
      %s53 = sphi 0, %s37
      %s59 = sphi 0, %s61
      %s62 = sphi 0, %s59
      %s63 = sphi 0, %s62
      %s79 = sphi 0, %s63
      %s83 = sphi 0, %s83
      %s85 = sphi 0, %s83
      %s86 = sphi 0, %s85
      %s100 = sphi 0, %s86
      %s104 = sphi 0, %s104
      %s106 = sphi 0, %s104
      %s107 = sphi 0, %s106
      %s121 = sphi 0, %s107
      %s125 = sphi 0, %s125
      %s127 = sphi 0, %s125
      %s128 = sphi 0, %s127
      %s142 = sphi 0, %s128
      %s146 = sphi 0, %s146
      %s148 = sphi 0, %s146
      %s149 = sphi 0, %s148
      %s163 = sphi 0, %s149
      %s167 = sphi 0, %s167
      %s169 = sphi 0, %s167
      %s170 = sphi 0, %s169
      %s184 = sphi 0, %s170
      %s188 = sphi 0, %s188
      %s190 = sphi 0, %s188
      %s191 = sphi 0, %s190
      %s205 = sphi 0, %s191
      %s209 = sphi 0, %s209
      %s211 = sphi 0, %s209
      %s212 = sphi 0, %s211
      %s226 = sphi 0, %s212
      %s230 = sphi 0, %s230
      %s232 = sphi 0, %s230
      %s233 = sphi 0, %s232
      %s247 = sphi 0, %s233
      %s251 = sphi 0, %s251
      %s253 = sphi 0, %s251
      %s254 = sphi 0, %s253
      %s268 = sphi 0, %s254
      %s274 = sphi 0, %s276
      %s277 = sphi 0, %s274
      %s278 = sphi 0, %s277
      %s294 = sphi 0, %s278
    $region4: #{tpu_custom_call.1} parent=1 // loop_header_branch
      %26 = sbr.rel (%p24) target = $region8
    $region5: #{tpu_custom_call.1} parent=1 // loop_body
      %s28 = ssub.s32 %s23, 1
      %s29 = ssub.s32 %s23, 2
      %s30 = sadd.s32 %s23, 1
      %s31 = ssub.s32 %s23, %s30
      %p32 = scmp.eq.s32.totalorder %s31, 0
      %s34 = sadd.s32 %s33, 1
      %s35 = scalar_select %p32, %s33, %s34
      %p38 = pneg %p32
      %p39 = scmp.eq.s32.totalorder %s23, 1
      %p40 = por %p38, %p39
      %p41 = scmp.ne.s32.totalorder %s33, %s36
      %p42 = scmp.eq.s32.totalorder %s23, 0
      %p43 = por %p41, %p42
      %p44 = scmp.ne.s32.totalorder %s33, %s36
      %p45 = scmp.eq.s32.totalorder %s28, 1
      %p46 = por %p44, %p45
      %p47 = scmp.ne.s32.totalorder %s36, %s37
      %p48 = scmp.eq.s32.totalorder %s28, 0
      %p49 = por %p47, %p48
      %p50 = scmp.ne.s32.totalorder %s36, %s37
      %p51 = scmp.eq.s32.totalorder %s29, 1
      %p52 = por %p50, %p51
      %p54 = scmp.ne.s32.totalorder %s37, %s53
      %p55 = scmp.eq.s32.totalorder %s29, 0
      %p56 = por %p54, %p55
      %s57 = ssub.s32 %s23, %s30
      %p58 = scmp.eq.s32.totalorder %s57, 0
      %s60 = sadd.s32 %s59, 1
      %s61 = scalar_select %p58, %s59, %s60
      %p64 = pneg %p58
      %p65 = scmp.eq.s32.totalorder %s23, 1
      %p66 = por %p64, %p65
      %p67 = scmp.ne.s32.totalorder %s59, %s62
      %p68 = scmp.eq.s32.totalorder %s23, 0
      %p69 = por %p67, %p68
      %p70 = scmp.ne.s32.totalorder %s59, %s62
      %p71 = scmp.eq.s32.totalorder %s28, 1
      %p72 = por %p70, %p71
      %p73 = scmp.ne.s32.totalorder %s62, %s63
      %p74 = scmp.eq.s32.totalorder %s28, 0
      %p75 = por %p73, %p74
      %p76 = scmp.ne.s32.totalorder %s62, %s63
      %p77 = scmp.eq.s32.totalorder %s29, 1
      %p78 = por %p76, %p77
      %p80 = scmp.ne.s32.totalorder %s63, %s79
      %p81 = scmp.eq.s32.totalorder %s29, 0
      %p82 = por %p80, %p81
      %s84 = sadd.s32 %s83, 1
      %p87 = scmp.eq.s32.totalorder %s23, 1
      %p88 = scmp.ne.s32.totalorder %s83, %s85
      %p89 = scmp.eq.s32.totalorder %s23, 0
      %p90 = por %p88, %p89
      %p91 = scmp.ne.s32.totalorder %s83, %s85
      %p92 = scmp.eq.s32.totalorder %s28, 1
      %p93 = por %p91, %p92
      %p94 = scmp.ne.s32.totalorder %s85, %s86
      %p95 = scmp.eq.s32.totalorder %s28, 0
      %p96 = por %p94, %p95
      %p97 = scmp.ne.s32.totalorder %s85, %s86
      %p98 = scmp.eq.s32.totalorder %s29, 1
      %p99 = por %p97, %p98
      %p101 = scmp.ne.s32.totalorder %s86, %s100
      %p102 = scmp.eq.s32.totalorder %s29, 0
      %p103 = por %p101, %p102
      %s105 = sadd.s32 %s104, 1
      %p108 = scmp.eq.s32.totalorder %s23, 1
      %p109 = scmp.ne.s32.totalorder %s104, %s106
      %p110 = scmp.eq.s32.totalorder %s23, 0
      %p111 = por %p109, %p110
      %p112 = scmp.ne.s32.totalorder %s104, %s106
      %p113 = scmp.eq.s32.totalorder %s28, 1
      %p114 = por %p112, %p113
      %p115 = scmp.ne.s32.totalorder %s106, %s107
      %p116 = scmp.eq.s32.totalorder %s28, 0
      %p117 = por %p115, %p116
      %p118 = scmp.ne.s32.totalorder %s106, %s107
      %p119 = scmp.eq.s32.totalorder %s29, 1
      %p120 = por %p118, %p119
      %p122 = scmp.ne.s32.totalorder %s107, %s121
      %p123 = scmp.eq.s32.totalorder %s29, 0
      %p124 = por %p122, %p123
      %s126 = sadd.s32 %s125, 1
      %p129 = scmp.eq.s32.totalorder %s23, 1
      %p130 = scmp.ne.s32.totalorder %s125, %s127
      %p131 = scmp.eq.s32.totalorder %s23, 0
      %p132 = por %p130, %p131
      %p133 = scmp.ne.s32.totalorder %s125, %s127
      %p134 = scmp.eq.s32.totalorder %s28, 1
      %p135 = por %p133, %p134
      %p136 = scmp.ne.s32.totalorder %s127, %s128
      %p137 = scmp.eq.s32.totalorder %s28, 0
      %p138 = por %p136, %p137
      %p139 = scmp.ne.s32.totalorder %s127, %s128
      %p140 = scmp.eq.s32.totalorder %s29, 1
      %p141 = por %p139, %p140
      %p143 = scmp.ne.s32.totalorder %s128, %s142
      %p144 = scmp.eq.s32.totalorder %s29, 0
      %p145 = por %p143, %p144
      %s147 = sadd.s32 %s146, 1
      %p150 = scmp.eq.s32.totalorder %s23, 1
      %p151 = scmp.ne.s32.totalorder %s146, %s148
      %p152 = scmp.eq.s32.totalorder %s23, 0
      %p153 = por %p151, %p152
      %p154 = scmp.ne.s32.totalorder %s146, %s148
      %p155 = scmp.eq.s32.totalorder %s28, 1
      %p156 = por %p154, %p155
      %p157 = scmp.ne.s32.totalorder %s148, %s149
      %p158 = scmp.eq.s32.totalorder %s28, 0
      %p159 = por %p157, %p158
      %p160 = scmp.ne.s32.totalorder %s148, %s149
      %p161 = scmp.eq.s32.totalorder %s29, 1
      %p162 = por %p160, %p161
      %p164 = scmp.ne.s32.totalorder %s149, %s163
      %p165 = scmp.eq.s32.totalorder %s29, 0
      %p166 = por %p164, %p165
      %s168 = sadd.s32 %s167, 1
      %p171 = scmp.eq.s32.totalorder %s23, 1
      %p172 = scmp.ne.s32.totalorder %s167, %s169
      %p173 = scmp.eq.s32.totalorder %s23, 0
      %p174 = por %p172, %p173
      %p175 = scmp.ne.s32.totalorder %s167, %s169
      %p176 = scmp.eq.s32.totalorder %s28, 1
      %p177 = por %p175, %p176
      %p178 = scmp.ne.s32.totalorder %s169, %s170
      %p179 = scmp.eq.s32.totalorder %s28, 0
      %p180 = por %p178, %p179
      %p181 = scmp.ne.s32.totalorder %s169, %s170
      %p182 = scmp.eq.s32.totalorder %s29, 1
      %p183 = por %p181, %p182
      %p185 = scmp.ne.s32.totalorder %s170, %s184
      %p186 = scmp.eq.s32.totalorder %s29, 0
      %p187 = por %p185, %p186
      %s189 = sadd.s32 %s188, 1
      %p192 = scmp.eq.s32.totalorder %s23, 1
      %p193 = scmp.ne.s32.totalorder %s188, %s190
      %p194 = scmp.eq.s32.totalorder %s23, 0
      %p195 = por %p193, %p194
      %p196 = scmp.ne.s32.totalorder %s188, %s190
      %p197 = scmp.eq.s32.totalorder %s28, 1
      %p198 = por %p196, %p197
      %p199 = scmp.ne.s32.totalorder %s190, %s191
      %p200 = scmp.eq.s32.totalorder %s28, 0
      %p201 = por %p199, %p200
      %p202 = scmp.ne.s32.totalorder %s190, %s191
      %p203 = scmp.eq.s32.totalorder %s29, 1
      %p204 = por %p202, %p203
      %p206 = scmp.ne.s32.totalorder %s191, %s205
      %p207 = scmp.eq.s32.totalorder %s29, 0
      %p208 = por %p206, %p207
      %s210 = sadd.s32 %s209, 1
      %p213 = scmp.eq.s32.totalorder %s23, 1
      %p214 = scmp.ne.s32.totalorder %s209, %s211
      %p215 = scmp.eq.s32.totalorder %s23, 0
      %p216 = por %p214, %p215
      %p217 = scmp.ne.s32.totalorder %s209, %s211
      %p218 = scmp.eq.s32.totalorder %s28, 1
      %p219 = por %p217, %p218
      %p220 = scmp.ne.s32.totalorder %s211, %s212
      %p221 = scmp.eq.s32.totalorder %s28, 0
      %p222 = por %p220, %p221
      %p223 = scmp.ne.s32.totalorder %s211, %s212
      %p224 = scmp.eq.s32.totalorder %s29, 1
      %p225 = por %p223, %p224
      %p227 = scmp.ne.s32.totalorder %s212, %s226
      %p228 = scmp.eq.s32.totalorder %s29, 0
      %p229 = por %p227, %p228
      %s231 = sadd.s32 %s230, 1
      %p234 = scmp.eq.s32.totalorder %s23, 1
      %p235 = scmp.ne.s32.totalorder %s230, %s232
      %p236 = scmp.eq.s32.totalorder %s23, 0
      %p237 = por %p235, %p236
      %p238 = scmp.ne.s32.totalorder %s230, %s232
      %p239 = scmp.eq.s32.totalorder %s28, 1
      %p240 = por %p238, %p239
      %p241 = scmp.ne.s32.totalorder %s232, %s233
      %p242 = scmp.eq.s32.totalorder %s28, 0
      %p243 = por %p241, %p242
      %p244 = scmp.ne.s32.totalorder %s232, %s233
      %p245 = scmp.eq.s32.totalorder %s29, 1
      %p246 = por %p244, %p245
      %p248 = scmp.ne.s32.totalorder %s233, %s247
      %p249 = scmp.eq.s32.totalorder %s29, 0
      %p250 = por %p248, %p249
      %s252 = sadd.s32 %s251, 1
      %p255 = scmp.eq.s32.totalorder %s23, 1
      %p256 = scmp.ne.s32.totalorder %s251, %s253
      %p257 = scmp.eq.s32.totalorder %s23, 0
      %p258 = por %p256, %p257
      %p259 = scmp.ne.s32.totalorder %s251, %s253
      %p260 = scmp.eq.s32.totalorder %s28, 1
      %p261 = por %p259, %p260
      %p262 = scmp.ne.s32.totalorder %s253, %s254
      %p263 = scmp.eq.s32.totalorder %s28, 0
      %p264 = por %p262, %p263
      %p265 = scmp.ne.s32.totalorder %s253, %s254
      %p266 = scmp.eq.s32.totalorder %s29, 1
      %p267 = por %p265, %p266
      %p269 = scmp.ne.s32.totalorder %s254, %s268
      %p270 = scmp.eq.s32.totalorder %s29, 0
      %p271 = por %p269, %p270
      %s272 = ssub.s32 %s23, %s30
      %p273 = scmp.eq.s32.totalorder %s272, 0
      %s275 = sadd.s32 %s274, 1
      %s276 = scalar_select %p273, %s274, %s275
      %p279 = pneg %p273
      %p280 = scmp.eq.s32.totalorder %s23, 1
      %p281 = por %p279, %p280
      %p282 = scmp.ne.s32.totalorder %s274, %s277
      %p283 = scmp.eq.s32.totalorder %s23, 0
      %p284 = por %p282, %p283
      %p285 = scmp.ne.s32.totalorder %s274, %s277
      %p286 = scmp.eq.s32.totalorder %s28, 1
      %p287 = por %p285, %p286
      %p288 = scmp.ne.s32.totalorder %s277, %s278
      %p289 = scmp.eq.s32.totalorder %s28, 0
      %p290 = por %p288, %p289
      %p291 = scmp.ne.s32.totalorder %s277, %s278
      %p292 = scmp.eq.s32.totalorder %s29, 1
      %p293 = por %p291, %p292
      %p295 = scmp.ne.s32.totalorder %s278, %s294
      %p296 = scmp.eq.s32.totalorder %s29, 0
      %p297 = por %p295, %p296
      %p298 = scmp.le.s32.totalorder 1, %s23
      %p299 = scmp.lt.s32.totalorder %s23, 3
      %p300 = pnand %p298, %p299
      %p301 = pneg %p300
      // Predicated region
      $region9: #{tpu_custom_call.1} parent=5 // pred_check
        _
      $region10: #{tpu_custom_call.1} parent=5 // pred_check_branch
        %303 = sbr.rel (%p300) target = $region12
      $region11: #{tpu_custom_call.1} parent=5 // pred_region
        %s304 = ssub.s32 %s23, 1
        // Predicated region
        $region13: #{tpu_custom_call.1} parent=11 // pred_check
          %p305 = pneg %p96
        $region14: #{tpu_custom_call.1} parent=11 // pred_check_branch
          %307 = sbr.rel (%p305) target = $region16
        $region15: #{tpu_custom_call.1} parent=11 // pred_region
          %s309 = ssub.s32 512, 512
          %310 = vsyncadd [#allocation6], %s309
          %s311 = sshll.u32 [#allocation5], 4
          %s312 = int_to_ptr.vmem [resolvable:$true] %s311
          %317 = dma.hbm_to_vmem [thread:$0]  %s2, 512, %s312, [#allocation6], 128, 128, 8
        $region16: #{tpu_custom_call.1} parent=11 // pred_fallthru
          _
        // Predicated region
        $region17: #{tpu_custom_call.1} parent=11 // pred_check
          %p318 = pneg %p117
        $region18: #{tpu_custom_call.1} parent=11 // pred_check_branch
          %320 = sbr.rel (%p318) target = $region20
        $region19: #{tpu_custom_call.1} parent=11 // pred_region
          _
        $region20: #{tpu_custom_call.1} parent=11 // pred_fallthru
          _
        // Predicated region
        $region21: #{tpu_custom_call.1} parent=11 // pred_check
          %p321 = pneg %p138
        $region22: #{tpu_custom_call.1} parent=11 // pred_check_branch
          %323 = sbr.rel (%p321) target = $region24
        $region23: #{tpu_custom_call.1} parent=11 // pred_region
          %s325 = ssub.s32 512, 512
          %326 = vsyncadd [#allocation6], %s325
          %s327 = sshll.u32 [#allocation7], 4
          %s328 = int_to_ptr.vmem [resolvable:$true] %s327
          %333 = dma.hbm_to_vmem [thread:$0]  %s4, 512, %s328, [#allocation6], 128, 128, 8
        $region24: #{tpu_custom_call.1} parent=11 // pred_fallthru
          _
        // Predicated region
        $region25: #{tpu_custom_call.1} parent=11 // pred_check
          %p334 = pneg %p159
        $region26: #{tpu_custom_call.1} parent=11 // pred_check_branch
          %336 = sbr.rel (%p334) target = $region28
        $region27: #{tpu_custom_call.1} parent=11 // pred_region
          _
        $region28: #{tpu_custom_call.1} parent=11 // pred_fallthru
          _
        // Predicated region
        $region29: #{tpu_custom_call.1} parent=11 // pred_check
          %p337 = pneg %p180
        $region30: #{tpu_custom_call.1} parent=11 // pred_check_branch
          %339 = sbr.rel (%p337) target = $region32
        $region31: #{tpu_custom_call.1} parent=11 // pred_region
          _
        $region32: #{tpu_custom_call.1} parent=11 // pred_fallthru
          _
        // Predicated region
        $region33: #{tpu_custom_call.1} parent=11 // pred_check
          %p340 = pneg %p201
        $region34: #{tpu_custom_call.1} parent=11 // pred_check_branch
          %342 = sbr.rel (%p340) target = $region36
        $region35: #{tpu_custom_call.1} parent=11 // pred_region
          _
        $region36: #{tpu_custom_call.1} parent=11 // pred_fallthru
          _
        // Predicated region
        $region37: #{tpu_custom_call.1} parent=11 // pred_check
          %p343 = pneg %p222
        $region38: #{tpu_custom_call.1} parent=11 // pred_check_branch
          %345 = sbr.rel (%p343) target = $region40
        $region39: #{tpu_custom_call.1} parent=11 // pred_region
          _
        $region40: #{tpu_custom_call.1} parent=11 // pred_fallthru
          _
        // Predicated region
        $region41: #{tpu_custom_call.1} parent=11 // pred_check
          %p346 = pneg %p243
        $region42: #{tpu_custom_call.1} parent=11 // pred_check_branch
          %348 = sbr.rel (%p346) target = $region44
        $region43: #{tpu_custom_call.1} parent=11 // pred_region
          _
        $region44: #{tpu_custom_call.1} parent=11 // pred_fallthru
          _
        // Predicated region
        $region45: #{tpu_custom_call.1} parent=11 // pred_check
          %p349 = pneg %p264
        $region46: #{tpu_custom_call.1} parent=11 // pred_check_branch
          %351 = sbr.rel (%p349) target = $region48
        $region47: #{tpu_custom_call.1} parent=11 // pred_region
          _
        $region48: #{tpu_custom_call.1} parent=11 // pred_fallthru
          _
      $region12: #{tpu_custom_call.1} parent=5 // pred_fallthru
        _
      %p352 = scmp.lt.s32.totalorder %s23, 2
      // Predicated region
      $region49: #{tpu_custom_call.1} parent=5 // pred_check
        %p353 = pneg %p352
      $region50: #{tpu_custom_call.1} parent=5 // pred_check_branch
        %355 = sbr.rel (%p353) target = $region52
      $region51: #{tpu_custom_call.1} parent=5 // pred_region
        // Predicated region
        $region53: #{tpu_custom_call.1} parent=51 // pred_check
          %p356 = pneg %p43
        $region54: #{tpu_custom_call.1} parent=51 // pred_check_branch
          %358 = sbr.rel (%p356) target = $region56
        $region55: #{tpu_custom_call.1} parent=51 // pred_region
          %p359 = scmp.lt.s32.totalorder %s23, 1
          %s360 = scalar_select %p359, %s23, 1
          %s361 = smul.addr %s360, 8
          %s362 = scalar_lea.vmem %s0, %s361
        $region56: #{tpu_custom_call.1} parent=51 // pred_fallthru
          _
        // Predicated region
        $region57: #{tpu_custom_call.1} parent=51 // pred_check
          %p363 = pneg %p69
        $region58: #{tpu_custom_call.1} parent=51 // pred_check_branch
          %365 = sbr.rel (%p363) target = $region60
        $region59: #{tpu_custom_call.1} parent=51 // pred_region
          %s366 = sand.u32 %s59, 1
          %s367 = scalar_lea.sflag [#allocation4], %s366
          %s368 = sand.u32 %s59, 1
          %s369 = smul.addr %s368, 8
          %s370 = scalar_lea.vmem [#allocation3], %s369
          %s372 = ssub.s32 128, 128
          %373 = vsyncadd %s367, %s372
          %s374 = smul.addr %s23, 128
          %s375 = scalar_lea.hbm %s1, %s374
          %s377 = sshll.u32 %s370, 4
          %s378 = int_to_ptr.vmem [resolvable:$true] %s377
          %380 = dma.hbm_to_vmem [thread:$0]  %s375, 128, %s378, %s367
        $region60: #{tpu_custom_call.1} parent=51 // pred_fallthru
          _
      $region52: #{tpu_custom_call.1} parent=5 // pred_fallthru
        _
      %p381 = scmp.le.s32.totalorder 1, %s23
      %p382 = scmp.lt.s32.totalorder %s23, 3
      %p383 = pnand %p381, %p382
      %p384 = pneg %p383
      // Predicated region
      $region61: #{tpu_custom_call.1} parent=5 // pred_check
        _
      $region62: #{tpu_custom_call.1} parent=5 // pred_check_branch
        %386 = sbr.rel (%p383) target = $region64
      $region63: #{tpu_custom_call.1} parent=5 // pred_region
        %s387 = ssub.s32 %s23, 1
        %s388 = sand.u32 %s62, 1
        %s389 = scalar_lea.sflag [#allocation4], %s388
        %s390 = sand.u32 %s62, 1
        %s391 = smul.addr %s390, 8
        %s392 = scalar_lea.vmem [#allocation3], %s391
        // Predicated region
        $region65: #{tpu_custom_call.1} parent=63 // pred_check
          %p393 = pneg %p75
        $region66: #{tpu_custom_call.1} parent=63 // pred_check_branch
          %395 = sbr.rel (%p393) target = $region68
        $region67: #{tpu_custom_call.1} parent=63 // pred_region
          %396 = dma.done %s389, 128
        $region68: #{tpu_custom_call.1} parent=63 // pred_fallthru
          _
        // Predicated region
        $region69: #{tpu_custom_call.1} parent=63 // pred_check
          %p397 = pneg %p96
        $region70: #{tpu_custom_call.1} parent=63 // pred_check_branch
          %399 = sbr.rel (%p397) target = $region72
        $region71: #{tpu_custom_call.1} parent=63 // pred_region
          %400 = dma.done [#allocation6], 512
        $region72: #{tpu_custom_call.1} parent=63 // pred_fallthru
          _
        // Predicated region
        $region73: #{tpu_custom_call.1} parent=63 // pred_check
          %p401 = pneg %p138
        $region74: #{tpu_custom_call.1} parent=63 // pred_check_branch
          %403 = sbr.rel (%p401) target = $region76
        $region75: #{tpu_custom_call.1} parent=63 // pred_region
          %404 = dma.done [#allocation6], 512
        $region76: #{tpu_custom_call.1} parent=63 // pred_fallthru
          _
        %p405 = scmp.lt.s32.totalorder %s28, 1
        %s406 = scalar_select %p405, %s28, 1
        %s407 = smul.addr %s406, 8
        %s408 = scalar_lea.vmem %s0, %s407
        %p409 = pneg %p49
        %p410 = pneg %p46
        %s411 = sand.u32 %s62, 1
        %s412 = scalar_lea.sflag [#allocation4], %s411
        %s413 = sand.u32 %s62, 1
        %s414 = smul.addr %s413, 8
        %s415 = scalar_lea.vmem [#allocation3], %s414
        %p416 = pneg %p75
        %p417 = pneg %p72
        %p418 = pneg %p96
        %p419 = pneg %p93
        %p420 = pneg %p117
        %p421 = pneg %p114
        %p422 = pneg %p138
        %p423 = pneg %p135
        %p424 = pneg %p159
        %p425 = pneg %p156
        %p426 = pneg %p180
        %p427 = pneg %p177
        %p428 = pneg %p201
        %p429 = pneg %p198
        %p430 = pneg %p222
        %p431 = pneg %p219
        %p432 = pneg %p243
        %p433 = pneg %p240
        %p434 = pneg %p264
        %p435 = pneg %p261
        %p436 = pneg %p290
        %p437 = pneg %p287
        %p438 = scmp.lt.s32.totalorder %s28, 1
        %s439 = scalar_select %p438, %s28, 1
        %s440 = smul.addr %s439, 8
        %s441 = scalar_lea.vmem %s11, %s440
        %p442 = scmp.lt.s32.totalorder %s28, 1
        %s443 = scalar_select %p442, %s28, 1
        %s444 = smul.addr %s443, 8
        %s445 = scalar_lea.vmem %s0, %s444
        %p446 = scmp.lt.s32.totalorder %s28, 1
        %s447 = scalar_select %p446, %s28, 1
        %s448 = smul.addr %s447, 8
        %s449 = scalar_lea.vmem %s11, %s448
        %v450 = vld [vmem:[%s445] sm:$0xff]
        %v451 = vld [vmem:[%s392] sm:$0xff]
        %v452 = vld [vmem:[#allocation5] sm:$0xff]
        %v453 = vld [vmem:[#allocation5 + $0x8] sm:$0xff]
        %v454 = vld [vmem:[#allocation5 + $0x10] sm:$0xff]
        %v455 = vld [vmem:[#allocation5 + $0x18] sm:$0xff]
        %v456 = vld [vmem:[%s3] sm:$0x1]
        %v458 = vlaneseq
        %v459 = vshrl.u32 %v458, 7
        %v460 = vsub.s32 0, %v459
        %v461 = vrot.slane %v456, %v460
        %vm463 = vcmask 261120
        %v465 = vsel %vm463, %v450, 0
        %467 = vmatprep.subr.mxu0 0.0
        %468 = vmatpush1.msra.mxu0 0.0
        %469 = vmatprep.subr.mxu0 0.0
        %470 = vmatpush1.msra.mxu0 0.0
        %471 = vmatprep.subr.mxu0 0.0
        %472 = vmatpush1.msra.mxu0 0.0
        %473 = vmatprep.subr.mxu0 0.0
        %474 = vmatpush1.msra.mxu0 0.0
        %475 = vmatprep.subr.mxu0 0.0
        %476 = vmatpush1.msra.mxu0 0.0
        %477 = vmatprep.subr.mxu0 0.0
        %478 = vmatpush1.msra.mxu0 0.0
        %479 = vmatprep.subr.mxu0 0.0
        %480 = vmatpush1.msra.mxu0 0.0
        %481 = vmatprep.subr.mxu0 0.0
        %482 = vmatpush1.msra.mxu0 0.0
        %483 = vmatprep.subr.mxu0 0.0
        %484 = vmatpush1.msra.mxu0 0.0
        %485 = vmatprep.subr.mxu0 0.0
        %486 = vmatpush1.msra.mxu0 0.0
        %487 = vmatprep.subr.mxu0 0.0
        %488 = vmatpush1.msra.mxu0 0.0
        %489 = vmatprep.subr.mxu0 0.0
        %490 = vmatpush1.msra.mxu0 0.0
        %491 = vmatprep.subr.mxu0 0.0
        %492 = vmatpush1.msra.mxu0 %v455
        %493 = vmatprep.subr.mxu0 0.0
        %494 = vmatpush1.msra.mxu0 %v454
        %495 = vmatprep.subr.mxu0 0.0
        %496 = vmatpush1.msra.mxu0 %v453
        %497 = vmatprep.subr.mxu0 0.0
        %498 = vmatpush1.msra.mxu0 %v452
        %499 = vmatprep.subr.mxu0 0.0
        %500 = vmatpush2.msra.mxu0 0.0
        %501 = vmatprep.subr.mxu0 0.0
        %502 = vmatpush2.msra.mxu0 0.0
        %503 = vmatprep.subr.mxu0 0.0
        %504 = vmatpush2.msra.mxu0 0.0
        %505 = vmatprep.subr.mxu0 0.0
        %506 = vmatpush2.msra.mxu0 0.0
        %507 = vmatprep.subr.mxu0 0.0
        %508 = vmatpush2.msra.mxu0 0.0
        %509 = vmatprep.subr.mxu0 0.0
        %510 = vmatpush2.msra.mxu0 0.0
        %511 = vmatprep.subr.mxu0 0.0
        %512 = vmatpush2.msra.mxu0 0.0
        %513 = vmatprep.subr.mxu0 0.0
        %514 = vmatpush2.msra.mxu0 0.0
        %515 = vmatprep.subr.mxu0 0.0
        %516 = vmatpush2.msra.mxu0 0.0
        %517 = vmatprep.subr.mxu0 0.0
        %518 = vmatpush2.msra.mxu0 0.0
        %519 = vmatprep.subr.mxu0 0.0
        %520 = vmatpush2.msra.mxu0 0.0
        %521 = vmatprep.subr.mxu0 0.0
        %522 = vmatpush2.msra.mxu0 0.0
        %523 = vmatprep.subr.mxu0 0.0
        %524 = vmatpush2.msra.mxu0 0.0
        %525 = vmatprep.subr.mxu0 0.0
        %526 = vmatpush2.msra.mxu0 0.0
        %527 = vmatprep.subr.mxu0 0.0
        %528 = vmatpush2.msra.mxu0 0.0
        %529 = vmatprep.subr.mxu0 0.0
        %530 = vmatpush2.msra.mxu0 0.0
        %531 = vmatprep.mubr.f32.mxu0 0.0
        %532 = vmatmul.mubr.f32.gmra.mxu0 %v465
        %v533 = vpop.f32.mrf.mxu0
        %v534 = vadd.f32 %v461, %v533
        %v535 = vpop.f32.mrf.mxu0
        %536 = vdwg.mxu0
        %v537 = vmax.f32 %v534, 0.0
        %v538 = vld [vmem:[#allocation7] sm:$0xff]
        %v539 = vld [vmem:[#allocation7 + $0x8] sm:$0xff]
        %v540 = vld [vmem:[#allocation7 + $0x10] sm:$0xff]
        %v541 = vld [vmem:[#allocation7 + $0x18] sm:$0xff]
        %v542 = vld [vmem:[%s5] sm:$0xff]
        %v543 = vld [vmem:[%s5 + $0x8] sm:$0xff]
        %v544 = vld [vmem:[%s5 + $0x10] sm:$0xff]
        %v545 = vld [vmem:[%s5 + $0x18] sm:$0xff]
        %v546 = vld [vmem:[%s5 + $0x20] sm:$0xff]
        %v547 = vld [vmem:[%s5 + $0x28] sm:$0xff]
        %v548 = vld [vmem:[%s5 + $0x30] sm:$0xff]
        %v549 = vld [vmem:[%s5 + $0x38] sm:$0xff]
        %vm550 = vcmask 523264
        %v552 = vsel %vm550, %v451, 0
        %554 = vmatprep.subr.mxu0 0.0
        %555 = vmatpush1.msra.mxu0 0.0
        %556 = vmatprep.subr.mxu0 0.0
        %557 = vmatpush1.msra.mxu0 0.0
        %558 = vmatprep.subr.mxu0 0.0
        %559 = vmatpush1.msra.mxu0 0.0
        %560 = vmatprep.subr.mxu0 0.0
        %561 = vmatpush1.msra.mxu0 0.0
        %562 = vmatprep.subr.mxu0 0.0
        %563 = vmatpush1.msra.mxu0 0.0
        %564 = vmatprep.subr.mxu0 0.0
        %565 = vmatpush1.msra.mxu0 0.0
        %566 = vmatprep.subr.mxu0 0.0
        %567 = vmatpush1.msra.mxu0 0.0
        %568 = vmatprep.subr.mxu0 0.0
        %569 = vmatpush1.msra.mxu0 0.0
        %570 = vmatprep.subr.mxu0 0.0
        %571 = vmatpush1.msra.mxu0 %v549
        %572 = vmatprep.subr.mxu0 0.0
        %573 = vmatpush1.msra.mxu0 %v548
        %574 = vmatprep.subr.mxu0 0.0
        %575 = vmatpush1.msra.mxu0 %v547
        %576 = vmatprep.subr.mxu0 0.0
        %577 = vmatpush1.msra.mxu0 %v546
        %578 = vmatprep.subr.mxu0 0.0
        %579 = vmatpush1.msra.mxu0 %v545
        %580 = vmatprep.subr.mxu0 0.0
        %581 = vmatpush1.msra.mxu0 %v544
        %582 = vmatprep.subr.mxu0 0.0
        %583 = vmatpush1.msra.mxu0 %v543
        %584 = vmatprep.subr.mxu0 0.0
        %585 = vmatpush1.msra.mxu0 %v542
        %586 = vmatprep.subr.mxu0 0.0
        %587 = vmatpush2.msra.mxu0 0.0
        %588 = vmatprep.subr.mxu0 0.0
        %589 = vmatpush2.msra.mxu0 0.0
        %590 = vmatprep.subr.mxu0 0.0
        %591 = vmatpush2.msra.mxu0 0.0
        %592 = vmatprep.subr.mxu0 0.0
        %593 = vmatpush2.msra.mxu0 0.0
        %594 = vmatprep.subr.mxu0 0.0
        %595 = vmatpush2.msra.mxu0 0.0
        %596 = vmatprep.subr.mxu0 0.0
        %597 = vmatpush2.msra.mxu0 0.0
        %598 = vmatprep.subr.mxu0 0.0
        %599 = vmatpush2.msra.mxu0 0.0
        %600 = vmatprep.subr.mxu0 0.0
        %601 = vmatpush2.msra.mxu0 0.0
        %602 = vmatprep.subr.mxu0 0.0
        %603 = vmatpush2.msra.mxu0 0.0
        %604 = vmatprep.subr.mxu0 0.0
        %605 = vmatpush2.msra.mxu0 0.0
        %606 = vmatprep.subr.mxu0 0.0
        %607 = vmatpush2.msra.mxu0 0.0
        %608 = vmatprep.subr.mxu0 0.0
        %609 = vmatpush2.msra.mxu0 0.0
        %610 = vmatprep.subr.mxu0 0.0
        %611 = vmatpush2.msra.mxu0 0.0
        %612 = vmatprep.subr.mxu0 0.0
        %613 = vmatpush2.msra.mxu0 0.0
        %614 = vmatprep.subr.mxu0 0.0
        %615 = vmatpush2.msra.mxu0 0.0
        %616 = vmatprep.subr.mxu0 0.0
        %617 = vmatpush2.msra.mxu0 0.0
        %618 = vmatprep.mubr.f32.mxu0 0.0
        %619 = vmatmul.mubr.f32.gmra.mxu0 %v552
        %v620 = vpop.f32.mrf.mxu0
        %v621 = vadd.f32 0.0, %v620
        %v622 = vpop.f32.mrf.mxu0
        %623 = vdwg.mxu0
        %v625 = vsel %vm463, %v537, 0
        %627 = vmatprep.subr.mxu0 0.0
        %628 = vmatpush1.msra.mxu0 0.0
        %629 = vmatprep.subr.mxu0 0.0
        %630 = vmatpush1.msra.mxu0 0.0
        %631 = vmatprep.subr.mxu0 0.0
        %632 = vmatpush1.msra.mxu0 0.0
        %633 = vmatprep.subr.mxu0 0.0
        %634 = vmatpush1.msra.mxu0 0.0
        %635 = vmatprep.subr.mxu0 0.0
        %636 = vmatpush1.msra.mxu0 0.0
        %637 = vmatprep.subr.mxu0 0.0
        %638 = vmatpush1.msra.mxu0 0.0
        %639 = vmatprep.subr.mxu0 0.0
        %640 = vmatpush1.msra.mxu0 0.0
        %641 = vmatprep.subr.mxu0 0.0
        %642 = vmatpush1.msra.mxu0 0.0
        %643 = vmatprep.subr.mxu0 0.0
        %644 = vmatpush1.msra.mxu0 0.0
        %645 = vmatprep.subr.mxu0 0.0
        %646 = vmatpush1.msra.mxu0 0.0
        %647 = vmatprep.subr.mxu0 0.0
        %648 = vmatpush1.msra.mxu0 0.0
        %649 = vmatprep.subr.mxu0 0.0
        %650 = vmatpush1.msra.mxu0 0.0
        %651 = vmatprep.subr.mxu0 0.0
        %652 = vmatpush1.msra.mxu0 %v541
        %653 = vmatprep.subr.mxu0 0.0
        %654 = vmatpush1.msra.mxu0 %v540
        %655 = vmatprep.subr.mxu0 0.0
        %656 = vmatpush1.msra.mxu0 %v539
        %657 = vmatprep.subr.mxu0 0.0
        %658 = vmatpush1.msra.mxu0 %v538
        %659 = vmatprep.subr.mxu0 0.0
        %660 = vmatpush2.msra.mxu0 0.0
        %661 = vmatprep.subr.mxu0 0.0
        %662 = vmatpush2.msra.mxu0 0.0
        %663 = vmatprep.subr.mxu0 0.0
        %664 = vmatpush2.msra.mxu0 0.0
        %665 = vmatprep.subr.mxu0 0.0
        %666 = vmatpush2.msra.mxu0 0.0
        %667 = vmatprep.subr.mxu0 0.0
        %668 = vmatpush2.msra.mxu0 0.0
        %669 = vmatprep.subr.mxu0 0.0
        %670 = vmatpush2.msra.mxu0 0.0
        %671 = vmatprep.subr.mxu0 0.0
        %672 = vmatpush2.msra.mxu0 0.0
        %673 = vmatprep.subr.mxu0 0.0
        %674 = vmatpush2.msra.mxu0 0.0
        %675 = vmatprep.subr.mxu0 0.0
        %676 = vmatpush2.msra.mxu0 0.0
        %677 = vmatprep.subr.mxu0 0.0
        %678 = vmatpush2.msra.mxu0 0.0
        %679 = vmatprep.subr.mxu0 0.0
        %680 = vmatpush2.msra.mxu0 0.0
        %681 = vmatprep.subr.mxu0 0.0
        %682 = vmatpush2.msra.mxu0 0.0
        %683 = vmatprep.subr.mxu0 0.0
        %684 = vmatpush2.msra.mxu0 0.0
        %685 = vmatprep.subr.mxu0 0.0
        %686 = vmatpush2.msra.mxu0 0.0
        %687 = vmatprep.subr.mxu0 0.0
        %688 = vmatpush2.msra.mxu0 0.0
        %689 = vmatprep.subr.mxu0 0.0
        %690 = vmatpush2.msra.mxu0 0.0
        %691 = vmatprep.mubr.f32.mxu0 0.0
        %692 = vmatmul.mubr.f32.gmra.mxu0 %v625
        %v693 = vpop.f32.mrf.mxu0
        %v694 = vadd.f32 %v621, %v693
        %v695 = vpop.f32.mrf.mxu0
        %696 = vdwg.mxu0
        %v697 = vld [vmem:[%s6] sm:$0x1]
        %v699 = vlaneseq
        %v700 = vshrl.u32 %v699, 7
        %v701 = vsub.s32 0, %v700
        %v702 = vrot.slane %v697, %v701
        %v704 = vadd.f32 %v694, %v702
        %v705 = vmax.f32 %v704, 0.0
        %v706 = vld [vmem:[%s7] sm:$0xff]
        %v707 = vld [vmem:[%s7 + $0x8] sm:$0xff]
        %v708 = vld [vmem:[%s7 + $0x10] sm:$0xff]
        %v709 = vld [vmem:[%s7 + $0x18] sm:$0xff]
        %v710 = vld [vmem:[%s7 + $0x20] sm:$0xff]
        %v711 = vld [vmem:[%s7 + $0x28] sm:$0xff]
        %v712 = vld [vmem:[%s7 + $0x30] sm:$0xff]
        %v713 = vld [vmem:[%s7 + $0x38] sm:$0xff]
        %v714 = vld [vmem:[%s8] sm:$0x1]
        %v716 = vlaneseq
        %v717 = vshrl.u32 %v716, 7
        %v718 = vsub.s32 0, %v717
        %v719 = vrot.slane %v714, %v718
        %v722 = vsel %vm550, %v705, 0
        %724 = vmatprep.subr.mxu0 0.0
        %725 = vmatpush1.msra.mxu0 0.0
        %726 = vmatprep.subr.mxu0 0.0
        %727 = vmatpush1.msra.mxu0 0.0
        %728 = vmatprep.subr.mxu0 0.0
        %729 = vmatpush1.msra.mxu0 0.0
        %730 = vmatprep.subr.mxu0 0.0
        %731 = vmatpush1.msra.mxu0 0.0
        %732 = vmatprep.subr.mxu0 0.0
        %733 = vmatpush1.msra.mxu0 0.0
        %734 = vmatprep.subr.mxu0 0.0
        %735 = vmatpush1.msra.mxu0 0.0
        %736 = vmatprep.subr.mxu0 0.0
        %737 = vmatpush1.msra.mxu0 0.0
        %738 = vmatprep.subr.mxu0 0.0
        %739 = vmatpush1.msra.mxu0 0.0
        %740 = vmatprep.subr.mxu0 0.0
        %741 = vmatpush1.msra.mxu0 %v713
        %742 = vmatprep.subr.mxu0 0.0
        %743 = vmatpush1.msra.mxu0 %v712
        %744 = vmatprep.subr.mxu0 0.0
        %745 = vmatpush1.msra.mxu0 %v711
        %746 = vmatprep.subr.mxu0 0.0
        %747 = vmatpush1.msra.mxu0 %v710
        %748 = vmatprep.subr.mxu0 0.0
        %749 = vmatpush1.msra.mxu0 %v709
        %750 = vmatprep.subr.mxu0 0.0
        %751 = vmatpush1.msra.mxu0 %v708
        %752 = vmatprep.subr.mxu0 0.0
        %753 = vmatpush1.msra.mxu0 %v707
        %754 = vmatprep.subr.mxu0 0.0
        %755 = vmatpush1.msra.mxu0 %v706
        %756 = vmatprep.subr.mxu0 0.0
        %757 = vmatpush2.msra.mxu0 0.0
        %758 = vmatprep.subr.mxu0 0.0
        %759 = vmatpush2.msra.mxu0 0.0
        %760 = vmatprep.subr.mxu0 0.0
        %761 = vmatpush2.msra.mxu0 0.0
        %762 = vmatprep.subr.mxu0 0.0
        %763 = vmatpush2.msra.mxu0 0.0
        %764 = vmatprep.subr.mxu0 0.0
        %765 = vmatpush2.msra.mxu0 0.0
        %766 = vmatprep.subr.mxu0 0.0
        %767 = vmatpush2.msra.mxu0 0.0
        %768 = vmatprep.subr.mxu0 0.0
        %769 = vmatpush2.msra.mxu0 0.0
        %770 = vmatprep.subr.mxu0 0.0
        %771 = vmatpush2.msra.mxu0 0.0
        %772 = vmatprep.subr.mxu0 0.0
        %773 = vmatpush2.msra.mxu0 0.0
        %774 = vmatprep.subr.mxu0 0.0
        %775 = vmatpush2.msra.mxu0 0.0
        %776 = vmatprep.subr.mxu0 0.0
        %777 = vmatpush2.msra.mxu0 0.0
        %778 = vmatprep.subr.mxu0 0.0
        %779 = vmatpush2.msra.mxu0 0.0
        %780 = vmatprep.subr.mxu0 0.0
        %781 = vmatpush2.msra.mxu0 0.0
        %782 = vmatprep.subr.mxu0 0.0
        %783 = vmatpush2.msra.mxu0 0.0
        %784 = vmatprep.subr.mxu0 0.0
        %785 = vmatpush2.msra.mxu0 0.0
        %786 = vmatprep.subr.mxu0 0.0
        %787 = vmatpush2.msra.mxu0 0.0
        %788 = vmatprep.mubr.f32.mxu0 0.0
        %789 = vmatmul.mubr.f32.gmra.mxu0 %v722
        %v790 = vpop.f32.mrf.mxu0
        %v791 = vadd.f32 %v719, %v790
        %v792 = vpop.f32.mrf.mxu0
        %793 = vdwg.mxu0
        %v794 = vmax.f32 %v791, 0.0
        %v795 = vld [vmem:[%s9] sm:$0x1]
        %v797 = vlaneseq
        %v798 = vshrl.u32 %v797, 7
        %v799 = vsub.s32 0, %v798
        %v800 = vrot.slane %v795, %v799
        %v802 = vmul.f32 %v794, %v800
        %vm803 = vcmask 130048
        %v804 = vsel %vm803, %v802, 0.0
        %805 = vadd.xlane.f32.xlu0 %v804
        %v806 = vpop.xlane.xlu0 %805
        %v807 = vld [vmem:[#allocation2] sm:$0x1]
        %v809 = vlaneseq
        %v810 = vshrl.u32 %v809, 7
        %v811 = vsub.s32 0, %v810
        %v812 = vrot.slane %v807, %v811
        %v814 = vadd.f32 %v806, %v812
        %vm815 = vcmask 7168
        %816 = vst.msk [vmem:[%s449] sm:$0xff] %vm815, %v814
        %p817 = scmp.lt.s32.totalorder %s28, 1
        %s818 = scalar_select %p817, %s28, 1
        %s819 = smul.addr %s818, 8
        %s820 = scalar_lea.vmem %s11, %s819
        // Predicated region
        $region77: #{tpu_custom_call.1} parent=63 // pred_check
          %p821 = pneg %p287
        $region78: #{tpu_custom_call.1} parent=63 // pred_check_branch
          %823 = sbr.rel (%p821) target = $region80
        $region79: #{tpu_custom_call.1} parent=63 // pred_region
          _
        $region80: #{tpu_custom_call.1} parent=63 // pred_fallthru
          _
      $region64: #{tpu_custom_call.1} parent=5 // pred_fallthru
        _
      %p824 = scmp.le.s32.totalorder 2, %s23
      // Predicated region
      $region81: #{tpu_custom_call.1} parent=5 // pred_check
        %p825 = pneg %p824
      $region82: #{tpu_custom_call.1} parent=5 // pred_check_branch
        %827 = sbr.rel (%p825) target = $region84
      $region83: #{tpu_custom_call.1} parent=5 // pred_region
        %s828 = ssub.s32 %s23, 2
        // Predicated region
        $region85: #{tpu_custom_call.1} parent=83 // pred_check
          %p829 = pneg %p293
        $region86: #{tpu_custom_call.1} parent=83 // pred_check_branch
          %831 = sbr.rel (%p829) target = $region88
        $region87: #{tpu_custom_call.1} parent=83 // pred_region
          %p832 = scmp.lt.s32.totalorder %s29, 1
          %s833 = scalar_select %p832, %s29, 1
          %s834 = smul.addr %s833, 8
          %s835 = scalar_lea.vmem %s11, %s834
        $region88: #{tpu_custom_call.1} parent=83 // pred_fallthru
          _
      $region84: #{tpu_custom_call.1} parent=5 // pred_fallthru
        _
    $region6: #{tpu_custom_call.1} parent=1 // loop_footer
      %s27 = sadd.s32 1, %s23
    $region7: #{tpu_custom_call.1} parent=1 // loop_footer_branch
      %22 = sbr.rel target = $region3
    $region8: #{tpu_custom_call.1} parent=1 // loop_exit
      _
    %836 = vsyncpa [#allocation4], 1
    %s837 = scalar_lea.sflag [#allocation4], 1
    %838 = vsyncpa %s837, 1
    %839 = vsyncpa [#allocation6], 1

</llo_original>
